<compile_context>
chip_gen: v7x
topology: tpu7x:2x2x1
jax: 0.10.0
libtpu: 0.0.40
codegen_flags: <defaults>
</compile_context>

<pallas_src>
import functools
import math

import jax
import jax.numpy as jnp
from jax.experimental import pallas as pl
from jax.experimental.pallas import tpu as pltpu


# ---------------------------------------------------------------------------
# Kernels
# ---------------------------------------------------------------------------

def _kernel_resident(x_ref, w_ref, consts_ref, params_ref, hs_ref, reward_ref,
                     *, act_dtype):
    """Resident-weight path: one grid step per (batch, seq-tile).

    x_ref:      (TS, E)   bf16 token-embedding tile                 [VMEM]
    w_ref:      (E, H)    bf16 backbone dense weight (resident)     [VMEM]
    consts_ref: (2, H)    f32 [backbone bias ; scalar_head weight]  [VMEM]
    params_ref: (3,)      f32 [head bias, reward_gain, reward_bias] [SMEM]
    hs_ref:     (TS, H)   bf16 output hidden-state tile             [VMEM]
    reward_ref: (8, 128)  f32 lane-dense reward block for (b, s)    [VMEM]
    """
    # Full-E matmul on the MXU, f32 accumulation internal to the dot (no VMEM RMW).
    pre = jnp.dot(x_ref[...], w_ref[...], preferred_element_type=jnp.float32)
    pre = pre + consts_ref[0:1, :]                       # backbone bias (1, H)

    h = jnp.tanh(pre.astype(act_dtype))                  # bf16 tanh on v6e/v7x
    hs_ref[...] = h.astype(hs_ref.dtype)

    # Reward head on this tile's last row (tiny O(H) reduce — VPU/XLU slack).
    last = h[-1:, :].astype(jnp.float32)                 # (1, H)
    r = jnp.sum(last * consts_ref[1:2, :], axis=-1, keepdims=True)   # (1, 1)
    r = r + params_ref[0]                                # scalar_head bias
    r = params_ref[1] * r + params_ref[2]                # gain / bias affine
    reward_ref[...] = jnp.broadcast_to(r, reward_ref.shape).astype(reward_ref.dtype)


def _kernel_ktiled(x_ref, w_ref, consts_ref, params_ref, hs_ref, reward_ref,
                   acc_ref, *, act_dtype):
    """K-tiled fallback path: grid (B, S/TS, E/TK) with f32 accumulator scratch."""
    k = pl.program_id(2)
    n_k = pl.num_programs(2)

    @pl.when(k == 0)
    def _():
        acc_ref[...] = jnp.zeros_like(acc_ref)

    acc_ref[...] += jnp.dot(x_ref[...], w_ref[...],
                            preferred_element_type=jnp.float32)

    @pl.when(k == n_k - 1)
    def _():
        pre = acc_ref[...] + consts_ref[0:1, :]
        h = jnp.tanh(pre.astype(act_dtype))
        hs_ref[...] = h.astype(hs_ref.dtype)

        last = h[-1:, :].astype(jnp.float32)
        r = jnp.sum(last * consts_ref[1:2, :], axis=-1, keepdims=True)
        r = r + params_ref[0]
        r = params_ref[1] * r + params_ref[2]
        reward_ref[...] = jnp.broadcast_to(r, reward_ref.shape).astype(reward_ref.dtype)


# ---------------------------------------------------------------------------
# Per-chip configuration
# ---------------------------------------------------------------------------

def _select_config(S, E, H):
    """Pick tile sizes / residency / vmem limit from the actual chip."""
    try:
        vmem_cap = int(pltpu.get_tpu_info().vmem_capacity_bytes)
    except Exception:
        vmem_cap = 64 * 1024 * 1024                      # conservative: v7x per-TC VMEM

    if vmem_cap >= 96 * 1024 * 1024:                     # v5e / v6e: 128 MiB physical
        vmem_limit = 100 * 1024 * 1024
    else:                                                # v7x: 64 MiB physical
        vmem_limit = min(48 * 1024 * 1024, (vmem_cap * 3) // 4)
    budget = int(vmem_limit * 0.85)                      # headroom for internal scratch

    try:
        kind = jax.devices()[0].device_kind.lower()
    except Exception:
        kind = ""
    old_gen = any(t in kind for t in ("v2", "v3", "v4", "v5"))
    act_dtype = jnp.float32 if old_gen else jnp.bfloat16  # no bf16 VPU/EUP on v5e
    max_ts = 512 if old_gen else 1024                     # v5e: single vst slot

    def _cands(total, cap, opts):
        c = [t for t in opts if t <= cap and total % t == 0]
        if total <= cap:
            c.append(total)
        c = sorted(set(c), reverse=True)
        return c if c else [total]

    ts_cands = _cands(S, max_ts, (1024, 512, 256, 128, 64, 32, 16, 8))
    tk_cands = _cands(E, 2048, (2048, 1024, 512, 256, 128))

    def resident_bytes(ts):
        return (E * H * 2                 # resident bf16 weight (single-buffered)
                + 2 * ts * E * 2          # x tile (double-buffered)
                + 2 * ts * H * 2          # hidden-state out tile (double-buffered)
                + 2 * 2 * H * 4           # merged constants
                + 2 * 8 * 128 * 4)        # reward tile

    def ktiled_bytes(ts, tk):
        return (2 * ts * tk * 2 + 2 * tk * H * 2 + ts * H * 4
                + 2 * ts * H * 2 + 2 * 2 * H * 4 + 2 * 8 * 128 * 4)

    if E * H * 2 <= vmem_limit // 2:
        for ts in ts_cands:
            if resident_bytes(ts) <= budget:
                return dict(ts=ts, tk=E, resident=True,
                            vmem_limit=vmem_limit, act_dtype=act_dtype)

    for ts in ts_cands:                                   # prefer large TS: weight
        for tk in tk_cands:                               # traffic ∝ 1/TS
            if ktiled_bytes(ts, tk) <= budget:
                return dict(ts=ts, tk=tk, resident=False,
                            vmem_limit=vmem_limit, act_dtype=act_dtype)

    return dict(ts=ts_cands[-1], tk=tk_cands[-1], resident=False,
                vmem_limit=vmem_limit, act_dtype=act_dtype)


# ---------------------------------------------------------------------------
# Wrapper
# ---------------------------------------------------------------------------

def reward_model_forward(x_emb, w_bb, b_bb, w_head, b_head, reward_gain, reward_bias):
    """Returns (hidden_states (B,S,H) bf16, reward (B,1) f32)."""
    B, S, E = x_emb.shape
    E2, H = w_bb.shape
    assert E == E2

    cfg = _select_config(S, E, H)
    TS, TK, resident = cfg["ts"], cfg["tk"], cfg["resident"]
    act_dtype, vmem_limit = cfg["act_dtype"], cfg["vmem_limit"]
    assert S % TS == 0 and E % TK == 0
    n_s = S // TS

    # bf16 MXU operands (f32 accumulate in-kernel); halves HBM traffic for x and W.
    x_bf = x_emb.astype(jnp.bfloat16)
    w_bf = w_bb.astype(jnp.bfloat16)
    consts = jnp.stack([jnp.asarray(b_bb, jnp.float32).reshape(H),
                        jnp.asarray(w_head, jnp.float32).reshape(H)], axis=0)  # (2, H)
    params = jnp.stack([jnp.asarray(b_head, jnp.float32),
                        jnp.asarray(reward_gain, jnp.float32),
                        jnp.asarray(reward_bias, jnp.float32)])                # (3,) SMEM

    out_shapes = (
        jax.ShapeDtypeStruct((B, S, H), jnp.bfloat16),          # hidden states
        jax.ShapeDtypeStruct((B, n_s * 8, 128), jnp.float32),   # per-s-tile reward slab
    )

    def build(single_buffer_consts):
        const_kw = {"pipeline_mode": pl.Buffered(1)} if single_buffer_consts else {}
        if resident:
            kernel = functools.partial(_kernel_resident, act_dtype=act_dtype)
            grid = (B, n_s)
            in_specs = [
                pl.BlockSpec((None, TS, E), lambda b, s: (b, s, 0)),        # x
                pl.BlockSpec((E, H), lambda b, s: (0, 0), **const_kw),      # W (resident)
                pl.BlockSpec((2, H), lambda b, s: (0, 0), **const_kw),      # [b_bb; w_head]
                pl.BlockSpec(memory_space=pltpu.MemorySpace.SMEM),          # scalars
            ]
            out_specs = (
                pl.BlockSpec((None, TS, H), lambda b, s: (b, s, 0)),        # hidden states
                pl.BlockSpec((None, 8, 128), lambda b, s: (b, s, 0)),       # reward slab
            )
            scratch = []
            dims = ("parallel", "parallel")
        else:
            kernel = functools.partial(_kernel_ktiled, act_dtype=act_dtype)
            n_k = E // TK
            grid = (B, n_s, n_k)
            in_specs = [
                pl.BlockSpec((None, TS, TK), lambda b, s, k: (b, s, k)),    # x
                pl.BlockSpec((TK, H), lambda b, s, k: (k, 0)),              # W K-tile
                pl.BlockSpec((2, H), lambda b, s, k: (0, 0), **const_kw),   # constants
                pl.BlockSpec(memory_space=pltpu.MemorySpace.SMEM),          # scalars
            ]
            out_specs = (
                pl.BlockSpec((None, TS, H), lambda b, s, k: (b, s, 0)),
                pl.BlockSpec((None, 8, 128), lambda b, s, k: (b, s, 0)),
            )
            scratch = [pltpu.VMEM((TS, H), jnp.float32)]                    # f32 accumulator
            dims = ("parallel", "parallel", "arbitrary")

        return pl.pallas_call(
            kernel,
            out_shape=out_shapes,
            grid_spec=pltpu.PrefetchScalarGridSpec(
                num_scalar_prefetch=0,
                grid=grid,
                in_specs=in_specs,
                out_specs=out_specs,
                scratch_shapes=scratch,
            ),
            compiler_params=pltpu.CompilerParams(
                dimension_semantics=dims,
                vmem_limit_bytes=vmem_limit,
            ),
        )

    try:
        hidden_states, reward_slab = build(True)(x_bf, w_bf, consts, params)
    except Exception:
        # This JAX build rejected pipeline_mode=pl.Buffered(1); fall back to
        # default double-buffering of the constant-index inputs.
        hidden_states, reward_slab = build(False)(x_bf, w_bf, consts, params)

    # Global last token lives in the last seq-tile; any row of its (8,128) block works.
    reward = reward_slab[:, -1, :1]                                   # (B, 1)
    return hidden_states, reward


# ---------------------------------------------------------------------------
# Self-test
# ---------------------------------------------------------------------------

if __name__ == "__main__":
    B, S, E, H, V = 2, 8, 32, 32, 64

    key = jax.random.PRNGKey(0)
    k_emb, k_ids, k_wbb, k_head = jax.random.split(key, 4)

    # Deterministic "backbone" parameters (stand-in).
    embed_table = jax.random.normal(k_emb, (V, E), dtype=jnp.float32) * 0.02
    input_ids = jax.random.randint(k_ids, (B, S), 0, V)
    w_bb = jax.random.normal(k_wbb, (E, H), dtype=jnp.float32) * math.sqrt(2.0 / E)
    b_bb = jnp.zeros((H,), dtype=jnp.float32)

    # Reward head exactly as in __init__:
    #   nn.Linear(H, 1): weight ~ N(0, std=1/sqrt(H+1)), bias = 0
    #   reward_gain = 1.0, reward_bias = 0.0
    w_head = jax.random.normal(k_head, (H,), dtype=jnp.float32) / math.sqrt(H + 1)
    b_head = jnp.float32(0.0)
    reward_gain = jnp.float32(1.0)
    reward_bias = jnp.float32(0.0)

    # Glue: embedding lookup in plain JAX.
    x_emb = embed_table[input_ids]  # (B, S, E)

    hidden_states, reward = reward_model_forward(
        x_emb, w_bb, b_bb, w_head, b_head, reward_gain, reward_bias
    )
    jax.block_until_ready((hidden_states, reward))

    # Reference check in plain JAX (same bf16-rounded MXU operands, f32 math).
    x_f = x_emb.astype(jnp.bfloat16).astype(jnp.float32)
    w_f = w_bb.astype(jnp.bfloat16).astype(jnp.float32)
    hs_ref = jnp.tanh(
        jnp.einsum("bse,eh->bsh", x_f, w_f, precision=jax.lax.Precision.HIGHEST) + b_bb
    )
    r_ref = jnp.sum(hs_ref[:, -1, :] * w_head, axis=-1, keepdims=True) + b_head
    r_ref = reward_gain * r_ref + reward_bias

    assert hidden_states.shape == (B, S, H) and reward.shape == (B, 1)
    assert jnp.allclose(hidden_states.astype(jnp.float32), hs_ref, atol=2e-2, rtol=2e-2)
    assert jnp.allclose(reward, r_ref, atol=2e-3, rtol=1e-3)

    print("KERNEL_OK")
</pallas_src>

<mosaic_0001>
module attributes {stable_mosaic.version = 11 : i64} {
  func.func @_kernel_resident(%arg0: i32, %arg1: i32, %arg2: memref<1x8x32xbf16, #tpu.memory_space<vmem>>, %arg3: memref<32x32xbf16, #tpu.memory_space<vmem>>, %arg4: memref<2x32xf32, #tpu.memory_space<vmem>>, %arg5: memref<3xf32, #tpu.memory_space<smem>>, %arg6: memref<1x8x32xbf16, #tpu.memory_space<vmem>>, %arg7: memref<1x8x128xf32, #tpu.memory_space<vmem>>) attributes {dimension_semantics = [#tpu.dimension_semantics<parallel>, #tpu.dimension_semantics<parallel>], iteration_bounds = array<i64: 2, 1>, scalar_prefetch = 0 : i64, scratch_operands = 0 : i64, tpu.core_type = #tpu.core_type<tc>, window_params = [{transform_indices = @transform_0, window_bounds = array<i64: 1, 8, 32>}, {pipeline_mode = #tpu.pipeline_mode<synchronous>, transform_indices = @transform_1, window_bounds = array<i64: 32, 32>}, {pipeline_mode = #tpu.pipeline_mode<synchronous>, transform_indices = @transform_2, window_bounds = array<i64: 2, 32>}, {transform_indices = @transform_3, window_bounds = array<i64: 3>}, {transform_indices = @transform_4, window_bounds = array<i64: 1, 8, 32>}, {transform_indices = @transform_5, window_bounds = array<i64: 1, 8, 128>}]} {
    %c0 = arith.constant 0 : index
    %c0_0 = arith.constant 0 : index
    %c0_1 = arith.constant 0 : index
    %0 = vector.load %arg2[%c0, %c0_0, %c0_1] : memref<1x8x32xbf16, #tpu.memory_space<vmem>>, vector<1x8x32xbf16>
    %1 = vector.shape_cast %0 : vector<1x8x32xbf16> to vector<8x32xbf16>
    %c0_2 = arith.constant 0 : index
    %c0_3 = arith.constant 0 : index
    %2 = vector.load %arg3[%c0_2, %c0_3] : memref<32x32xbf16, #tpu.memory_space<vmem>>, vector<32x32xbf16>
    %cst = arith.constant dense<0.000000e+00> : vector<8x32xf32>
    %3 = tpu.matmul %1, %2, %cst {dimension_numbers = #tpu.dot_dimension_numbers<[1], [0], [0], [1], [0, 0, 1, 1], [], []>} : vector<8x32xbf16>, vector<32x32xbf16>, vector<8x32xf32> -> vector<8x32xf32>
    %c0_4 = arith.constant 0 : index
    %c0_5 = arith.constant 0 : index
    %4 = vector.load %arg4[%c0_4, %c0_5] : memref<2x32xf32, #tpu.memory_space<vmem>>, vector<1x32xf32>
    %5 = vector.broadcast %4 : vector<1x32xf32> to vector<8x32xf32>
    %6 = arith.addf %3, %5 : vector<8x32xf32>
    %7 = arith.truncf %6 : vector<8x32xf32> to vector<8x32xbf16>
    %8 = math.tanh %7 : vector<8x32xbf16>
    %c0_6 = arith.constant 0 : index
    %c0_7 = arith.constant 0 : index
    %c0_8 = arith.constant 0 : index
    %9 = vector.load %arg6[%c0_6, %c0_7, %c0_8] : memref<1x8x32xbf16, #tpu.memory_space<vmem>>, vector<1x8x32xbf16>
    %10 = vector.shape_cast %9 : vector<1x8x32xbf16> to vector<8x32xbf16>
    %11 = vector.shape_cast %8 : vector<8x32xbf16> to vector<1x8x32xbf16>
    tpu.vector_store %arg6[%c0_6, %c0_7, %c0_8], %11 {strides = array<i32>} : memref<1x8x32xbf16, #tpu.memory_space<vmem>>, vector<1x8x32xbf16>,
    %12 = vector.extract_strided_slice %8 {offsets = [7, 0], sizes = [1, 32], strides = [1, 1]} : vector<8x32xbf16> to vector<1x32xbf16>
    %13 = arith.extf %12 : vector<1x32xbf16> to vector<1x32xf32>
    %c1 = arith.constant 1 : index
    %c0_9 = arith.constant 0 : index
    %14 = vector.load %arg4[%c1, %c0_9] : memref<2x32xf32, #tpu.memory_space<vmem>>, vector<1x32xf32>
    %15 = arith.mulf %13, %14 : vector<1x32xf32>
    %cst_10 = arith.constant dense<0.000000e+00> : vector<1xf32>
    %16 = vector.multi_reduction <add>, %15, %cst_10 [1] : vector<1x32xf32> to vector<1xf32>
    %17 = vector.shape_cast %16 : vector<1xf32> to vector<1x1xf32>
    %c0_11 = arith.constant 0 : index
    %18 = memref.load %arg5[%c0_11] : memref<3xf32, #tpu.memory_space<smem>>
    %19 = vector.broadcast %18 : f32 to vector<1x1xf32>
    %20 = arith.addf %17, %19 : vector<1x1xf32>
    %c1_12 = arith.constant 1 : index
    %21 = memref.load %arg5[%c1_12] : memref<3xf32, #tpu.memory_space<smem>>
    %22 = vector.broadcast %21 : f32 to vector<1x1xf32>
    %23 = arith.mulf %22, %20 : vector<1x1xf32>
    %c2 = arith.constant 2 : index
    %24 = memref.load %arg5[%c2] : memref<3xf32, #tpu.memory_space<smem>>
    %25 = vector.broadcast %24 : f32 to vector<1x1xf32>
    %26 = arith.addf %23, %25 : vector<1x1xf32>
    %27 = vector.shape_cast %26 : vector<1x1xf32> to vector<1x1xf32>
    %28 = vector.broadcast %27 : vector<1x1xf32> to vector<8x128xf32>
    %c0_13 = arith.constant 0 : index
    %c0_14 = arith.constant 0 : index
    %c0_15 = arith.constant 0 : index
    %29 = vector.load %arg7[%c0_13, %c0_14, %c0_15] : memref<1x8x128xf32, #tpu.memory_space<vmem>>, vector<1x8x128xf32>
    %30 = vector.shape_cast %29 : vector<1x8x128xf32> to vector<8x128xf32>
    %31 = vector.shape_cast %28 : vector<8x128xf32> to vector<1x8x128xf32>
    tpu.vector_store %arg7[%c0_13, %c0_14, %c0_15], %31 {strides = array<i32>} : memref<1x8x128xf32, #tpu.memory_space<vmem>>, vector<1x8x128xf32>,
    return
  }
  func.func @transform_0(%arg0: i32, %arg1: i32) -> (i32, i32, i32) {
    %c0_i32 = arith.constant 0 : i32
    %c0_i32_0 = arith.constant 0 : i32
    return %arg0, %arg1, %c0_i32 : i32, i32, i32
  }
  func.func @transform_1(%arg0: i32, %arg1: i32) -> (i32, i32) {
    %c0_i32 = arith.constant 0 : i32
    %c0_i32_0 = arith.constant 0 : i32
    %c0_i32_1 = arith.constant 0 : i32
    return %c0_i32, %c0_i32_0 : i32, i32
  }
  func.func @transform_2(%arg0: i32, %arg1: i32) -> (i32, i32) {
    %c0_i32 = arith.constant 0 : i32
    %c0_i32_0 = arith.constant 0 : i32
    %c0_i32_1 = arith.constant 0 : i32
    return %c0_i32, %c0_i32_0 : i32, i32
  }
  func.func @transform_3(%arg0: i32, %arg1: i32) -> i32 {
    %c0_i32 = arith.constant 0 : i32
    %c0_i32_0 = arith.constant 0 : i32
    return %c0_i32 : i32
  }
  func.func @transform_4(%arg0: i32, %arg1: i32) -> (i32, i32, i32) {
    %c0_i32 = arith.constant 0 : i32
    %c0_i32_0 = arith.constant 0 : i32
    return %arg0, %arg1, %c0_i32 : i32, i32, i32
  }
  func.func @transform_5(%arg0: i32, %arg1: i32) -> (i32, i32, i32) {
    %c0_i32 = arith.constant 0 : i32
    %c0_i32_0 = arith.constant 0 : i32
    return %arg0, %arg1, %c0_i32 : i32, i32, i32
  }
}

module attributes {stable_mosaic.version = 11 : i64} {
  func.func @_kernel_resident(%arg0: i32, %arg1: i32, %arg2: memref<1x8x32xbf16, #tpu.memory_space<vmem>>, %arg3: memref<32x32xbf16, #tpu.memory_space<vmem>>, %arg4: memref<2x32xf32, #tpu.memory_space<vmem>>, %arg5: memref<3xf32, #tpu.memory_space<smem>>, %arg6: memref<1x8x32xbf16, #tpu.memory_space<vmem>>, %arg7: memref<1x8x128xf32, #tpu.memory_space<vmem>>) attributes {dimension_semantics = [#tpu.dimension_semantics<parallel>, #tpu.dimension_semantics<parallel>], iteration_bounds = array<i64: 2, 1>, scalar_prefetch = 0 : i64, scratch_operands = 0 : i64, tpu.core_type = #tpu.core_type<tc>, window_params = [{transform_indices = @transform_0, window_bounds = array<i64: 1, 8, 32>}, {pipeline_mode = #tpu.pipeline_mode<synchronous>, transform_indices = @transform_1, window_bounds = array<i64: 32, 32>}, {pipeline_mode = #tpu.pipeline_mode<synchronous>, transform_indices = @transform_2, window_bounds = array<i64: 2, 32>}, {transform_indices = @transform_3, window_bounds = array<i64: 3>}, {transform_indices = @transform_4, window_bounds = array<i64: 1, 8, 32>}, {transform_indices = @transform_5, window_bounds = array<i64: 1, 8, 128>}]} {
    %c0 = arith.constant 0 : index
    %c0_0 = arith.constant 0 : index
    %c0_1 = arith.constant 0 : index
    %0 = vector.load %arg2[%c0, %c0_0, %c0_1] : memref<1x8x32xbf16, #tpu.memory_space<vmem>>, vector<1x8x32xbf16>
    %1 = vector.shape_cast %0 : vector<1x8x32xbf16> to vector<8x32xbf16>
    %c0_2 = arith.constant 0 : index
    %c0_3 = arith.constant 0 : index
    %2 = vector.load %arg3[%c0_2, %c0_3] : memref<32x32xbf16, #tpu.memory_space<vmem>>, vector<32x32xbf16>
    %cst = arith.constant dense<0.000000e+00> : vector<8x32xf32>
    %3 = tpu.matmul %1, %2, %cst {dimension_numbers = #tpu.dot_dimension_numbers<[1], [0], [0], [1], [0, 0, 1, 1], [], []>} : vector<8x32xbf16>, vector<32x32xbf16>, vector<8x32xf32> -> vector<8x32xf32>
    %c0_4 = arith.constant 0 : index
    %c0_5 = arith.constant 0 : index
    %4 = vector.load %arg4[%c0_4, %c0_5] : memref<2x32xf32, #tpu.memory_space<vmem>>, vector<1x32xf32>
    %5 = vector.broadcast %4 : vector<1x32xf32> to vector<8x32xf32>
    %6 = arith.addf %3, %5 : vector<8x32xf32>
    %7 = arith.truncf %6 : vector<8x32xf32> to vector<8x32xbf16>
    %8 = math.tanh %7 : vector<8x32xbf16>
    %c0_6 = arith.constant 0 : index
    %c0_7 = arith.constant 0 : index
    %c0_8 = arith.constant 0 : index
    %9 = vector.load %arg6[%c0_6, %c0_7, %c0_8] : memref<1x8x32xbf16, #tpu.memory_space<vmem>>, vector<1x8x32xbf16>
    %10 = vector.shape_cast %9 : vector<1x8x32xbf16> to vector<8x32xbf16>
    %11 = vector.shape_cast %8 : vector<8x32xbf16> to vector<1x8x32xbf16>
    tpu.vector_store %arg6[%c0_6, %c0_7, %c0_8], %11 {strides = array<i32>} : memref<1x8x32xbf16, #tpu.memory_space<vmem>>, vector<1x8x32xbf16>,
    %12 = vector.extract_strided_slice %8 {offsets = [7, 0], sizes = [1, 32], strides = [1, 1]} : vector<8x32xbf16> to vector<1x32xbf16>
    %13 = arith.extf %12 : vector<1x32xbf16> to vector<1x32xf32>
    %c1 = arith.constant 1 : index
    %c0_9 = arith.constant 0 : index
    %14 = vector.load %arg4[%c1, %c0_9] : memref<2x32xf32, #tpu.memory_space<vmem>>, vector<1x32xf32>
    %15 = arith.mulf %13, %14 : vector<1x32xf32>
    %cst_10 = arith.constant dense<0.000000e+00> : vector<1xf32>
    %16 = vector.multi_reduction <add>, %15, %cst_10 [1] : vector<1x32xf32> to vector<1xf32>
    %17 = vector.shape_cast %16 : vector<1xf32> to vector<1x1xf32>
    %c0_11 = arith.constant 0 : index
    %18 = memref.load %arg5[%c0_11] : memref<3xf32, #tpu.memory_space<smem>>
    %19 = vector.broadcast %18 : f32 to vector<1x1xf32>
    %20 = arith.addf %17, %19 : vector<1x1xf32>
    %c1_12 = arith.constant 1 : index
    %21 = memref.load %arg5[%c1_12] : memref<3xf32, #tpu.memory_space<smem>>
    %22 = vector.broadcast %21 : f32 to vector<1x1xf32>
    %23 = arith.mulf %22, %20 : vector<1x1xf32>
    %c2 = arith.constant 2 : index
    %24 = memref.load %arg5[%c2] : memref<3xf32, #tpu.memory_space<smem>>
    %25 = vector.broadcast %24 : f32 to vector<1x1xf32>
    %26 = arith.addf %23, %25 : vector<1x1xf32>
    %27 = vector.shape_cast %26 : vector<1x1xf32> to vector<1x1xf32>
    %28 = vector.broadcast %27 : vector<1x1xf32> to vector<8x128xf32>
    %c0_13 = arith.constant 0 : index
    %c0_14 = arith.constant 0 : index
    %c0_15 = arith.constant 0 : index
    %29 = vector.load %arg7[%c0_13, %c0_14, %c0_15] : memref<1x8x128xf32, #tpu.memory_space<vmem>>, vector<1x8x128xf32>
    %30 = vector.shape_cast %29 : vector<1x8x128xf32> to vector<8x128xf32>
    %31 = vector.shape_cast %28 : vector<8x128xf32> to vector<1x8x128xf32>
    tpu.vector_store %arg7[%c0_13, %c0_14, %c0_15], %31 {strides = array<i32>} : memref<1x8x128xf32, #tpu.memory_space<vmem>>, vector<1x8x128xf32>,
    return
  }
  func.func @transform_0(%arg0: i32, %arg1: i32) -> (i32, i32, i32) {
    %c0_i32 = arith.constant 0 : i32
    %c0_i32_0 = arith.constant 0 : i32
    return %arg0, %arg1, %c0_i32 : i32, i32, i32
  }
  func.func @transform_1(%arg0: i32, %arg1: i32) -> (i32, i32) {
    %c0_i32 = arith.constant 0 : i32
    %c0_i32_0 = arith.constant 0 : i32
    %c0_i32_1 = arith.constant 0 : i32
    return %c0_i32, %c0_i32_0 : i32, i32
  }
  func.func @transform_2(%arg0: i32, %arg1: i32) -> (i32, i32) {
    %c0_i32 = arith.constant 0 : i32
    %c0_i32_0 = arith.constant 0 : i32
    %c0_i32_1 = arith.constant 0 : i32
    return %c0_i32, %c0_i32_0 : i32, i32
  }
  func.func @transform_3(%arg0: i32, %arg1: i32) -> i32 {
    %c0_i32 = arith.constant 0 : i32
    %c0_i32_0 = arith.constant 0 : i32
    return %c0_i32 : i32
  }
  func.func @transform_4(%arg0: i32, %arg1: i32) -> (i32, i32, i32) {
    %c0_i32 = arith.constant 0 : i32
    %c0_i32_0 = arith.constant 0 : i32
    return %arg0, %arg1, %c0_i32 : i32, i32, i32
  }
  func.func @transform_5(%arg0: i32, %arg1: i32) -> (i32, i32, i32) {
    %c0_i32 = arith.constant 0 : i32
    %c0_i32_0 = arith.constant 0 : i32
    return %arg0, %arg1, %c0_i32 : i32, i32, i32
  }
}

</mosaic_0001>

<llo_original>
// kernel: tpu_custom_call.1
$region0: #{tpu_custom_call.1}
  #allocation0 [shape = 'u32[]', space=smem, size = 0x4, offset = 0x4, fixed_abs, tag = 'smem constant byte address 0x4 - core index']
  #allocation1 [shape = 'u32[144,128]{1,0:T(1,128)}', space=vmem, size = 0x12000, scoped, tag = 'internal scratch']
  %s0 = inlined_call_operand.hbm [shape: bf16[2,8,32], index: 0, kind: input, shape index: {}]
  %s1 = inlined_call_operand.hbm [shape: bf16[32,32], index: 1, kind: input, shape index: {}]
  %s2 = inlined_call_operand.vmem [shape: f32[2,32], index: 2, kind: input, shape index: {}]
  %s3 = inlined_call_operand.vmem [shape: f32[3], index: 3, kind: input, shape index: {}]
  %s4 = inlined_call_operand.hbm [shape: bf16[2,8,32], index: 4, kind: output, shape index: {0}]
  %s5 = inlined_call_operand.hbm [shape: f32[2,8,128], index: 5, kind: output, shape index: {1}]
  %6 = xla_tuple %s4, %s5
  %s7 = sld [smem:[#allocation0]]
  $region69: #{tpu_custom_call.1} parent=0
    _
  %s9 = ssub.s32 1, %s7
  %s10 = scalar_select 0, %s9, %s7
  $region1: #{tpu_custom_call.1} parent=0
    #allocation2 [shape = 'u8[4096]{0}', space=vmem, size = 0x1000, scoped, tag = 'input window, operand 0']
    #allocation3 [shape = 's32[2]{0}', space=sflag, size = 0x8, scoped, tag = 'scoped memory for tpu_custom_call.1']
    #allocation4 [shape = 's32[2]{0}', space=sflag, size = 0x8, scoped, tag = 'scoped memory for tpu_custom_call.1']
    #allocation5 [shape = 's32[2]{0}', space=sflag, size = 0x8, scoped, tag = 'scoped memory for tpu_custom_call.1']
    #allocation6 [shape = 'u8[8192]{0}', space=vmem, size = 0x2000, scoped, tag = 'input window, operand 1, single buffered']
    #allocation7 [shape = 's32[1]{0}', space=sflag, size = 0x4, scoped, tag = 'scoped memory for tpu_custom_call.1']
    #allocation8 [shape = 'u8[512]{0}', space=smem, size = 0x200, scoped, tag = 'input window, operand 3, single buffered']
    #allocation9 [shape = 'u8[4096]{0}', space=vmem, size = 0x1000, scoped, tag = 'output window, operand 0']
    #allocation10 [shape = 'u8[8192]{0}', space=vmem, size = 0x2000, scoped, tag = 'output window, operand 1']
    #allocation11 [shape = 's32[2]{0}', space=sflag, size = 0x8, scoped, tag = 'scoped memory for tpu_custom_call.1']
    %11 = vsyncpa [#allocation3], 0
    %s12 = scalar_lea.sflag [#allocation3], 1
    %13 = vsyncpa %s12, 0
    %14 = vsyncpa [#allocation7], 0
    %15 = vsyncpa [#allocation5], 0
    %16 = vsyncpa [#allocation4], 0
    %s17 = scalar_lea.sflag [#allocation4], 1
    %18 = vsyncpa %s17, 0
    %19 = vsyncpa [#allocation11], 0
    %s20 = scalar_lea.sflag [#allocation11], 1
    %21 = vsyncpa %s20, 0
    loop: start=0, step=1, limit=4
    $region2: #{tpu_custom_call.1} parent=1 // loop_pre_header
      _
    $region3: #{tpu_custom_call.1} parent=1 // loop_header
      %s23 = sphi 0, %s27
      %p24 = scmp.ge.s32.totalorder %s23, 4
      %s30 = sphi 0, %s42
      %s31 = sphi 0, %s38
      %s32 = sphi 0, %s30
      %s33 = sphi 0, %s31
      %s34 = sphi 0, %s32
      %s35 = sphi 0, %s33
      %s47 = sphi 0, %s49
      %s50 = sphi 0, %s47
      %s51 = sphi 0, %s50
      %s67 = sphi 0, %s51
      %s71 = sphi 0, %s71
      %s73 = sphi 0, %s71
      %s74 = sphi 0, %s73
      %s88 = sphi 0, %s74
      %s92 = sphi 0, %s92
      %s94 = sphi 0, %s92
      %s95 = sphi 0, %s94
      %s109 = sphi 0, %s95
      %s113 = sphi 0, %s113
      %s115 = sphi 0, %s113
      %s116 = sphi 0, %s115
      %s130 = sphi 0, %s116
      %s138 = sphi 0, %s140
      %s141 = sphi 0, %s138
      %s142 = sphi 0, %s141
      %s158 = sphi 0, %s142
      %s166 = sphi 0, %s168
      %s169 = sphi 0, %s166
      %s170 = sphi 0, %s169
      %s186 = sphi 0, %s170
    $region4: #{tpu_custom_call.1} parent=1 // loop_header_branch
      %26 = sbr.rel (%p24) target = $region8
    $region5: #{tpu_custom_call.1} parent=1 // loop_body
      %s28 = ssub.s32 %s23, 1
      %s29 = ssub.s32 %s23, 2
      %s36 = sadd.s32 1, %s31
      %p37 = scmp.ge.s32.totalorder %s36, 1
      %s38 = scalar_select %p37, 0, %s36
      %s39 = sadd.s32 1, %s30
      %s40 = scalar_select %p37, %s39, %s30
      %p41 = scmp.ge.s32.totalorder %s40, 2
      %s42 = scalar_select %p41, 0, %s40
      %s43 = ssub.s32 %s30, %s42
      %s44 = ssub.s32 %s31, %s38
      %s45 = sor.u32 %s43, %s44
      %p46 = scmp.eq.s32.totalorder %s45, 0
      %s48 = sadd.s32 %s47, 1
      %s49 = scalar_select %p46, %s47, %s48
      %p52 = pneg %p46
      %p53 = scmp.eq.s32.totalorder %s23, 1
      %p54 = por %p52, %p53
      %p55 = scmp.ne.s32.totalorder %s47, %s50
      %p56 = scmp.eq.s32.totalorder %s23, 0
      %p57 = por %p55, %p56
      %p58 = scmp.ne.s32.totalorder %s47, %s50
      %p59 = scmp.eq.s32.totalorder %s28, 1
      %p60 = por %p58, %p59
      %p61 = scmp.ne.s32.totalorder %s50, %s51
      %p62 = scmp.eq.s32.totalorder %s28, 0
      %p63 = por %p61, %p62
      %p64 = scmp.ne.s32.totalorder %s50, %s51
      %p65 = scmp.eq.s32.totalorder %s29, 1
      %p66 = por %p64, %p65
      %p68 = scmp.ne.s32.totalorder %s51, %s67
      %p69 = scmp.eq.s32.totalorder %s29, 0
      %p70 = por %p68, %p69
      %s72 = sadd.s32 %s71, 1
      %p75 = scmp.eq.s32.totalorder %s23, 1
      %p76 = scmp.ne.s32.totalorder %s71, %s73
      %p77 = scmp.eq.s32.totalorder %s23, 0
      %p78 = por %p76, %p77
      %p79 = scmp.ne.s32.totalorder %s71, %s73
      %p80 = scmp.eq.s32.totalorder %s28, 1
      %p81 = por %p79, %p80
      %p82 = scmp.ne.s32.totalorder %s73, %s74
      %p83 = scmp.eq.s32.totalorder %s28, 0
      %p84 = por %p82, %p83
      %p85 = scmp.ne.s32.totalorder %s73, %s74
      %p86 = scmp.eq.s32.totalorder %s29, 1
      %p87 = por %p85, %p86
      %p89 = scmp.ne.s32.totalorder %s74, %s88
      %p90 = scmp.eq.s32.totalorder %s29, 0
      %p91 = por %p89, %p90
      %s93 = sadd.s32 %s92, 1
      %p96 = scmp.eq.s32.totalorder %s23, 1
      %p97 = scmp.ne.s32.totalorder %s92, %s94
      %p98 = scmp.eq.s32.totalorder %s23, 0
      %p99 = por %p97, %p98
      %p100 = scmp.ne.s32.totalorder %s92, %s94
      %p101 = scmp.eq.s32.totalorder %s28, 1
      %p102 = por %p100, %p101
      %p103 = scmp.ne.s32.totalorder %s94, %s95
      %p104 = scmp.eq.s32.totalorder %s28, 0
      %p105 = por %p103, %p104
      %p106 = scmp.ne.s32.totalorder %s94, %s95
      %p107 = scmp.eq.s32.totalorder %s29, 1
      %p108 = por %p106, %p107
      %p110 = scmp.ne.s32.totalorder %s95, %s109
      %p111 = scmp.eq.s32.totalorder %s29, 0
      %p112 = por %p110, %p111
      %s114 = sadd.s32 %s113, 1
      %p117 = scmp.eq.s32.totalorder %s23, 1
      %p118 = scmp.ne.s32.totalorder %s113, %s115
      %p119 = scmp.eq.s32.totalorder %s23, 0
      %p120 = por %p118, %p119
      %p121 = scmp.ne.s32.totalorder %s113, %s115
      %p122 = scmp.eq.s32.totalorder %s28, 1
      %p123 = por %p121, %p122
      %p124 = scmp.ne.s32.totalorder %s115, %s116
      %p125 = scmp.eq.s32.totalorder %s28, 0
      %p126 = por %p124, %p125
      %p127 = scmp.ne.s32.totalorder %s115, %s116
      %p128 = scmp.eq.s32.totalorder %s29, 1
      %p129 = por %p127, %p128
      %p131 = scmp.ne.s32.totalorder %s116, %s130
      %p132 = scmp.eq.s32.totalorder %s29, 0
      %p133 = por %p131, %p132
      %s134 = ssub.s32 %s30, %s42
      %s135 = ssub.s32 %s31, %s38
      %s136 = sor.u32 %s134, %s135
      %p137 = scmp.eq.s32.totalorder %s136, 0
      %s139 = sadd.s32 %s138, 1
      %s140 = scalar_select %p137, %s138, %s139
      %p143 = pneg %p137
      %p144 = scmp.eq.s32.totalorder %s23, 1
      %p145 = por %p143, %p144
      %p146 = scmp.ne.s32.totalorder %s138, %s141
      %p147 = scmp.eq.s32.totalorder %s23, 0
      %p148 = por %p146, %p147
      %p149 = scmp.ne.s32.totalorder %s138, %s141
      %p150 = scmp.eq.s32.totalorder %s28, 1
      %p151 = por %p149, %p150
      %p152 = scmp.ne.s32.totalorder %s141, %s142
      %p153 = scmp.eq.s32.totalorder %s28, 0
      %p154 = por %p152, %p153
      %p155 = scmp.ne.s32.totalorder %s141, %s142
      %p156 = scmp.eq.s32.totalorder %s29, 1
      %p157 = por %p155, %p156
      %p159 = scmp.ne.s32.totalorder %s142, %s158
      %p160 = scmp.eq.s32.totalorder %s29, 0
      %p161 = por %p159, %p160
      %s162 = ssub.s32 %s30, %s42
      %s163 = ssub.s32 %s31, %s38
      %s164 = sor.u32 %s162, %s163
      %p165 = scmp.eq.s32.totalorder %s164, 0
      %s167 = sadd.s32 %s166, 1
      %s168 = scalar_select %p165, %s166, %s167
      %p171 = pneg %p165
      %p172 = scmp.eq.s32.totalorder %s23, 1
      %p173 = por %p171, %p172
      %p174 = scmp.ne.s32.totalorder %s166, %s169
      %p175 = scmp.eq.s32.totalorder %s23, 0
      %p176 = por %p174, %p175
      %p177 = scmp.ne.s32.totalorder %s166, %s169
      %p178 = scmp.eq.s32.totalorder %s28, 1
      %p179 = por %p177, %p178
      %p180 = scmp.ne.s32.totalorder %s169, %s170
      %p181 = scmp.eq.s32.totalorder %s28, 0
      %p182 = por %p180, %p181
      %p183 = scmp.ne.s32.totalorder %s169, %s170
      %p184 = scmp.eq.s32.totalorder %s29, 1
      %p185 = por %p183, %p184
      %p187 = scmp.ne.s32.totalorder %s170, %s186
      %p188 = scmp.eq.s32.totalorder %s29, 0
      %p189 = por %p187, %p188
      %p190 = scmp.le.s32.totalorder 1, %s23
      %p191 = scmp.lt.s32.totalorder %s23, 3
      %p192 = pnand %p190, %p191
      %p193 = pneg %p192
      // Predicated region
      $region9: #{tpu_custom_call.1} parent=5 // pred_check
        _
      $region10: #{tpu_custom_call.1} parent=5 // pred_check_branch
        %195 = sbr.rel (%p192) target = $region12
      $region11: #{tpu_custom_call.1} parent=5 // pred_region
        %s196 = ssub.s32 %s23, 1
        // Predicated region
        $region13: #{tpu_custom_call.1} parent=11 // pred_check
          %p197 = pneg %p84
        $region14: #{tpu_custom_call.1} parent=11 // pred_check_branch
          %199 = sbr.rel (%p197) target = $region16
        $region15: #{tpu_custom_call.1} parent=11 // pred_region
          %s201 = ssub.s32 256, 256
          %202 = vsyncadd [#allocation7], %s201
          %s203 = sshll.u32 [#allocation6], 4
          %s204 = int_to_ptr.vmem [resolvable:$true] %s203
          %209 = dma.hbm_to_vmem [thread:$0]  %s1, 256, %s204, [#allocation7], 64, 64, 4
        $region16: #{tpu_custom_call.1} parent=11 // pred_fallthru
          _
        // Predicated region
        $region17: #{tpu_custom_call.1} parent=11 // pred_check
          %p210 = pneg %p105
        $region18: #{tpu_custom_call.1} parent=11 // pred_check_branch
          %212 = sbr.rel (%p210) target = $region20
        $region19: #{tpu_custom_call.1} parent=11 // pred_region
          _
        $region20: #{tpu_custom_call.1} parent=11 // pred_fallthru
          _
        // Predicated region
        $region21: #{tpu_custom_call.1} parent=11 // pred_check
          %p213 = pneg %p126
        $region22: #{tpu_custom_call.1} parent=11 // pred_check_branch
          %215 = sbr.rel (%p213) target = $region24
        $region23: #{tpu_custom_call.1} parent=11 // pred_region
          %s217 = ssub.s32 16, 16
          %218 = vsyncadd [#allocation5], %s217
          %s220 = sshll.u32 %s3, 4
          %s221 = int_to_ptr.vmem [resolvable:$true] %s220
          %223 = dma.vmem_to_smem %s221, 16, [#allocation8], [#allocation5]
        $region24: #{tpu_custom_call.1} parent=11 // pred_fallthru
          _
      $region12: #{tpu_custom_call.1} parent=5 // pred_fallthru
        _
      %p224 = scmp.lt.s32.totalorder %s23, 2
      // Predicated region
      $region25: #{tpu_custom_call.1} parent=5 // pred_check
        %p225 = pneg %p224
      $region26: #{tpu_custom_call.1} parent=5 // pred_check_branch
        %227 = sbr.rel (%p225) target = $region28
      $region27: #{tpu_custom_call.1} parent=5 // pred_region
        // Predicated region
        $region29: #{tpu_custom_call.1} parent=27 // pred_check
          %p228 = pneg %p57
        $region30: #{tpu_custom_call.1} parent=27 // pred_check_branch
          %230 = sbr.rel (%p228) target = $region32
        $region31: #{tpu_custom_call.1} parent=27 // pred_region
          %s231 = sand.u32 %s47, 1
          %s232 = scalar_lea.sflag [#allocation3], %s231
          %s233 = sand.u32 %s47, 1
          %s234 = smul.addr %s233, 4
          %s235 = scalar_lea.vmem [#allocation2], %s234
          %s237 = ssub.s32 64, 64
          %238 = vsyncadd %s232, %s237
          %s239 = sadd.s32 %s31, %s30
          %s240 = smul.addr %s239, 64
          %s241 = scalar_lea.hbm %s0, %s240
          %s243 = sshll.u32 %s235, 4
          %s244 = int_to_ptr.vmem [resolvable:$true] %s243
          %246 = dma.hbm_to_vmem [thread:$0]  %s241, 64, %s244, %s232
        $region32: #{tpu_custom_call.1} parent=27 // pred_fallthru
          _
      $region28: #{tpu_custom_call.1} parent=5 // pred_fallthru
        _
      %p247 = scmp.le.s32.totalorder 1, %s23
      %p248 = scmp.lt.s32.totalorder %s23, 3
      %p249 = pnand %p247, %p248
      %p250 = pneg %p249
      // Predicated region
      $region33: #{tpu_custom_call.1} parent=5 // pred_check
        _
      $region34: #{tpu_custom_call.1} parent=5 // pred_check_branch
        %252 = sbr.rel (%p249) target = $region36
      $region35: #{tpu_custom_call.1} parent=5 // pred_region
        %s253 = ssub.s32 %s23, 1
        %s254 = sand.u32 %s50, 1
        %s255 = scalar_lea.sflag [#allocation3], %s254
        %s256 = sand.u32 %s50, 1
        %s257 = smul.addr %s256, 4
        %s258 = scalar_lea.vmem [#allocation2], %s257
        // Predicated region
        $region37: #{tpu_custom_call.1} parent=35 // pred_check
          %p259 = pneg %p63
        $region38: #{tpu_custom_call.1} parent=35 // pred_check_branch
          %261 = sbr.rel (%p259) target = $region40
        $region39: #{tpu_custom_call.1} parent=35 // pred_region
          %262 = dma.done %s255, 64
        $region40: #{tpu_custom_call.1} parent=35 // pred_fallthru
          _
        // Predicated region
        $region41: #{tpu_custom_call.1} parent=35 // pred_check
          %p263 = pneg %p84
        $region42: #{tpu_custom_call.1} parent=35 // pred_check_branch
          %265 = sbr.rel (%p263) target = $region44
        $region43: #{tpu_custom_call.1} parent=35 // pred_region
          %266 = dma.done [#allocation7], 256
        $region44: #{tpu_custom_call.1} parent=35 // pred_fallthru
          _
        // Predicated region
        $region45: #{tpu_custom_call.1} parent=35 // pred_check
          %p267 = pneg %p126
        $region46: #{tpu_custom_call.1} parent=35 // pred_check_branch
          %269 = sbr.rel (%p267) target = $region48
        $region47: #{tpu_custom_call.1} parent=35 // pred_region
          %270 = dma.done [#allocation5], 16
        $region48: #{tpu_custom_call.1} parent=35 // pred_fallthru
          _
        %271 = sfence
        %s272 = sand.u32 %s50, 1
        %s273 = scalar_lea.sflag [#allocation3], %s272
        %s274 = sand.u32 %s50, 1
        %s275 = smul.addr %s274, 4
        %s276 = scalar_lea.vmem [#allocation2], %s275
        %p277 = pneg %p63
        %p278 = pneg %p60
        %p279 = pneg %p84
        %p280 = pneg %p81
        %p281 = pneg %p105
        %p282 = pneg %p102
        %p283 = pneg %p126
        %p284 = pneg %p123
        %p285 = pneg %p154
        %p286 = pneg %p151
        %s287 = sand.u32 %s141, 1
        %s288 = scalar_lea.sflag [#allocation4], %s287
        %s289 = sand.u32 %s141, 1
        %s290 = smul.addr %s289, 4
        %s291 = scalar_lea.vmem [#allocation9], %s290
        %p292 = pneg %p182
        %p293 = pneg %p179
        %s294 = sand.u32 %s169, 1
        %s295 = scalar_lea.sflag [#allocation11], %s294
        %s296 = sand.u32 %s169, 1
        %s297 = smul.addr %s296, 8
        %s298 = scalar_lea.vmem [#allocation10], %s297
        %v300 = vld [vmem:[%s258] sm:$0xf]
        %v301 = vld [vmem:[#allocation6] sm:$0xf]
        %v302 = vld [vmem:[#allocation6 + $0x4] sm:$0xf]
        %v303 = vld [vmem:[#allocation6 + $0x8] sm:$0xf]
        %v304 = vld [vmem:[#allocation6 + $0xc] sm:$0xf]
        %v305 = vld [vmem:[%s2] sm:$0x1]
        %v306 = vlaneseq
        %v307 = vshrl.u32 %v306, 7
        %v308 = vsub.s32 0, %v307
        %v309 = vrot.slane %v305, %v308
        %v314 = vunpack.c.l.b16 %v301
        %v315 = vunpack.c.l.b16 %v302
        %v316 = vunpack.c.l.b16 %v303
        %v317 = vunpack.c.l.b16 %v304
        %v318 = vpack.c.b16 %v315, %v314
        %v319 = vpack.c.b16 %v317, %v316
        %vm322 = vcmask 261120
        %v324 = vsel %vm322, %v300, 0
        %326 = vmatprep.subr.bf16.mxu0 0
        %327 = vmatpush1.bf16.msra.mxu0 %v318
        %328 = vmatprep.subr.bf16.mxu0 0
        %329 = vmatpush1.bf16.msra.mxu0 %v319
        %330 = vmatprep.subr.bf16.mxu0 0
        %331 = vmatpush1.bf16.msra.mxu0 0
        %332 = vmatprep.subr.bf16.mxu0 0
        %333 = vmatpush1.bf16.msra.mxu0 0
        %334 = vmatprep.subr.bf16.mxu0 0
        %335 = vmatpush1.bf16.msra.mxu0 0
        %336 = vmatprep.subr.bf16.mxu0 0
        %337 = vmatpush1.bf16.msra.mxu0 0
        %338 = vmatprep.subr.bf16.mxu0 0
        %339 = vmatpush1.bf16.msra.mxu0 0
        %340 = vmatprep.subr.bf16.mxu0 0
        %341 = vmatpush1.bf16.msra.mxu0 0
        %342 = vmatprep.subr.bf16.mxu0 0
        %343 = vmatpush1.bf16.msra.mxu0 0
        %344 = vmatprep.subr.bf16.mxu0 0
        %345 = vmatpush1.bf16.msra.mxu0 0
        %346 = vmatprep.subr.bf16.mxu0 0
        %347 = vmatpush1.bf16.msra.mxu0 0
        %348 = vmatprep.subr.bf16.mxu0 0
        %349 = vmatpush1.bf16.msra.mxu0 0
        %350 = vmatprep.subr.bf16.mxu0 0
        %351 = vmatpush1.bf16.msra.mxu0 0
        %352 = vmatprep.subr.bf16.mxu0 0
        %353 = vmatpush1.bf16.msra.mxu0 0
        %354 = vmatprep.subr.bf16.mxu0 0
        %355 = vmatpush1.bf16.msra.mxu0 0
        %356 = vmatprep.subr.bf16.mxu0 0
        %357 = vmatpush1.bf16.msra.mxu0 0
        %358 = vmatprep.mubr.bf16.mxu0 0
        %359 = vmatmul.mubr.bf16.gmra.mrb[0].mxu0 %v324
        %v360 = vpop.f32.mrb[0].mxu0
        %v361 = vadd.f32 %v309, %v360
        %v362 = vpop.f32.mrb[0].mxu0
        %v363 = vpop.f32.mrb[0].mxu0
        %v364 = vpop.f32.mrb[0].mxu0
        %365 = vdwg.mxu0
        %v366 = vpack.c.bf16 %v361, %v361
        %v367 = vtanh.bf16.pop %v366
        %vm368 = vcmask 257024
        %369 = vst.msk [vmem:[%s291] sm:$0xf] %vm368, %v367
        %v370 = vunpack.c.l.bf16 %v367
        %v371 = vld [vmem:[%s2 + $0x1] sm:$0x1]
        %v373 = vrot.slane %v371, 1
        %v375 = vmul.f32 %v370, %v373
        %vm376 = vcmask 261127
        %v377 = vsel %vm376, %v375, 0.0
        %378 = vadd.xlane.f32.xlu0 %v377
        %v379 = vpop.xlane.xlu0 %378
        %s380 = sld [smem:[#allocation8]]
        %v381 = vstv %s380
        %v382 = vadd.f32 %v379, %v381
        %s383 = sld [smem:[#allocation8 + $0x1]]
        %v384 = vstv %s383
        %v385 = vmul.f32 %v384, %v382
        %s386 = sld [smem:[#allocation8 + $0x2]]
        %v387 = vstv %s386
        %v388 = vadd.f32 %v385, %v387
        %v389 = vlaneseq
        %v390 = vshrl.u32 %v389, 7
        %v391 = vsub.s32 7, %v390
        %v392 = vrot.slane %v388, %v391
        %393 = vst [vmem:[%s298] sm:$0xff] %v392
        %s394 = sand.u32 %s141, 1
        %s395 = scalar_lea.sflag [#allocation4], %s394
        %s396 = sand.u32 %s141, 1
        %s397 = smul.addr %s396, 4
        %s398 = scalar_lea.vmem [#allocation9], %s397
        %s399 = sand.u32 %s169, 1
        %s400 = scalar_lea.sflag [#allocation11], %s399
        %s401 = sand.u32 %s169, 1
        %s402 = smul.addr %s401, 8
        %s403 = scalar_lea.vmem [#allocation10], %s402
        // Predicated region
        $region49: #{tpu_custom_call.1} parent=35 // pred_check
          %p404 = pneg %p151
        $region50: #{tpu_custom_call.1} parent=35 // pred_check_branch
          %406 = sbr.rel (%p404) target = $region52
        $region51: #{tpu_custom_call.1} parent=35 // pred_region
          %s408 = ssub.s32 64, 64
          %409 = vsyncadd %s395, %s408
          %s410 = sadd.s32 %s33, %s32
          %s411 = smul.addr %s410, 64
          %s412 = scalar_lea.hbm %s4, %s411
          %s414 = sshll.u32 %s398, 4
          %s415 = int_to_ptr.vmem [resolvable:$true] %s414
          %417 = dma.vmem_to_hbm [thread:$0]  %s415, 64, %s412, %s395
        $region52: #{tpu_custom_call.1} parent=35 // pred_fallthru
          _
        // Predicated region
        $region53: #{tpu_custom_call.1} parent=35 // pred_check
          %p418 = pneg %p179
        $region54: #{tpu_custom_call.1} parent=35 // pred_check_branch
          %420 = sbr.rel (%p418) target = $region56
        $region55: #{tpu_custom_call.1} parent=35 // pred_region
          %s422 = ssub.s32 128, 128
          %423 = vsyncadd %s400, %s422
          %s424 = sadd.s32 %s33, %s32
          %s425 = smul.addr %s424, 128
          %s426 = scalar_lea.hbm %s5, %s425
          %s428 = sshll.u32 %s403, 4
          %s429 = int_to_ptr.vmem [resolvable:$true] %s428
          %431 = dma.vmem_to_hbm [thread:$0]  %s429, 128, %s426, %s400
        $region56: #{tpu_custom_call.1} parent=35 // pred_fallthru
          _
      $region36: #{tpu_custom_call.1} parent=5 // pred_fallthru
        _
      %p432 = scmp.le.s32.totalorder 2, %s23
      // Predicated region
      $region57: #{tpu_custom_call.1} parent=5 // pred_check
        %p433 = pneg %p432
      $region58: #{tpu_custom_call.1} parent=5 // pred_check_branch
        %435 = sbr.rel (%p433) target = $region60
      $region59: #{tpu_custom_call.1} parent=5 // pred_region
        %s436 = ssub.s32 %s23, 2
        // Predicated region
        $region61: #{tpu_custom_call.1} parent=59 // pred_check
          %p437 = pneg %p157
        $region62: #{tpu_custom_call.1} parent=59 // pred_check_branch
          %439 = sbr.rel (%p437) target = $region64
        $region63: #{tpu_custom_call.1} parent=59 // pred_region
          %s440 = sand.u32 %s142, 1
          %s441 = scalar_lea.sflag [#allocation4], %s440
          %s442 = sand.u32 %s142, 1
          %s443 = smul.addr %s442, 4
          %s444 = scalar_lea.vmem [#allocation9], %s443
          %445 = dma.done %s441, 64
        $region64: #{tpu_custom_call.1} parent=59 // pred_fallthru
          _
        // Predicated region
        $region65: #{tpu_custom_call.1} parent=59 // pred_check
          %p446 = pneg %p185
        $region66: #{tpu_custom_call.1} parent=59 // pred_check_branch
          %448 = sbr.rel (%p446) target = $region68
        $region67: #{tpu_custom_call.1} parent=59 // pred_region
          %s449 = sand.u32 %s170, 1
          %s450 = scalar_lea.sflag [#allocation11], %s449
          %s451 = sand.u32 %s170, 1
          %s452 = smul.addr %s451, 8
          %s453 = scalar_lea.vmem [#allocation10], %s452
          %454 = dma.done %s450, 128
        $region68: #{tpu_custom_call.1} parent=59 // pred_fallthru
          _
      $region60: #{tpu_custom_call.1} parent=5 // pred_fallthru
        _
    $region6: #{tpu_custom_call.1} parent=1 // loop_footer
      %s27 = sadd.s32 1, %s23
    $region7: #{tpu_custom_call.1} parent=1 // loop_footer_branch
      %22 = sbr.rel target = $region3
    $region8: #{tpu_custom_call.1} parent=1 // loop_exit
      _
    %455 = vsyncpa [#allocation3], 1
    %s456 = scalar_lea.sflag [#allocation3], 1
    %457 = vsyncpa %s456, 1
    %458 = vsyncpa [#allocation7], 1
    %459 = vsyncpa [#allocation4], 1
    %s460 = scalar_lea.sflag [#allocation4], 1
    %461 = vsyncpa %s460, 1
    %462 = vsyncpa [#allocation11], 1
    %s463 = scalar_lea.sflag [#allocation11], 1
    %464 = vsyncpa %s463, 1
    %465 = vsyncpa [#allocation5], 1
    %s466 = scalar_lea.sflag [#allocation5], 1
    %467 = vsyncpa %s466, 1

// kernel: tpu_custom_call.1
$region0: #{tpu_custom_call.1}
  #allocation0 [shape = 'u32[]', space=smem, size = 0x4, offset = 0x4, fixed_abs, tag = 'smem constant byte address 0x4 - core index']
  #allocation1 [shape = 'u32[144,128]{1,0:T(1,128)}', space=vmem, size = 0x12000, scoped, tag = 'internal scratch']
  %s0 = inlined_call_operand.hbm [shape: bf16[2,8,32], index: 0, kind: input, shape index: {}]
  %s1 = inlined_call_operand.hbm [shape: bf16[32,32], index: 1, kind: input, shape index: {}]
  %s2 = inlined_call_operand.vmem [shape: f32[2,32], index: 2, kind: input, shape index: {}]
  %s3 = inlined_call_operand.vmem [shape: f32[3], index: 3, kind: input, shape index: {}]
  %s4 = inlined_call_operand.hbm [shape: bf16[2,8,32], index: 4, kind: output, shape index: {0}]
  %s5 = inlined_call_operand.hbm [shape: f32[2,8,128], index: 5, kind: output, shape index: {1}]
  %6 = xla_tuple %s4, %s5
  %s7 = sld [smem:[#allocation0]]
  $region69: #{tpu_custom_call.1} parent=0
    _
  %s9 = ssub.s32 1, %s7
  %s10 = scalar_select 0, %s9, %s7
  $region1: #{tpu_custom_call.1} parent=0
    #allocation2 [shape = 'u8[4096]{0}', space=vmem, size = 0x1000, scoped, tag = 'input window, operand 0']
    #allocation3 [shape = 's32[2]{0}', space=sflag, size = 0x8, scoped, tag = 'scoped memory for tpu_custom_call.1']
    #allocation4 [shape = 's32[2]{0}', space=sflag, size = 0x8, scoped, tag = 'scoped memory for tpu_custom_call.1']
    #allocation5 [shape = 's32[2]{0}', space=sflag, size = 0x8, scoped, tag = 'scoped memory for tpu_custom_call.1']
    #allocation6 [shape = 'u8[8192]{0}', space=vmem, size = 0x2000, scoped, tag = 'input window, operand 1, single buffered']
    #allocation7 [shape = 's32[1]{0}', space=sflag, size = 0x4, scoped, tag = 'scoped memory for tpu_custom_call.1']
    #allocation8 [shape = 'u8[512]{0}', space=smem, size = 0x200, scoped, tag = 'input window, operand 3, single buffered']
    #allocation9 [shape = 'u8[4096]{0}', space=vmem, size = 0x1000, scoped, tag = 'output window, operand 0']
    #allocation10 [shape = 'u8[8192]{0}', space=vmem, size = 0x2000, scoped, tag = 'output window, operand 1']
    #allocation11 [shape = 's32[2]{0}', space=sflag, size = 0x8, scoped, tag = 'scoped memory for tpu_custom_call.1']
    %11 = vsyncpa [#allocation3], 0
    %s12 = scalar_lea.sflag [#allocation3], 1
    %13 = vsyncpa %s12, 0
    %14 = vsyncpa [#allocation7], 0
    %15 = vsyncpa [#allocation5], 0
    %16 = vsyncpa [#allocation4], 0
    %s17 = scalar_lea.sflag [#allocation4], 1
    %18 = vsyncpa %s17, 0
    %19 = vsyncpa [#allocation11], 0
    %s20 = scalar_lea.sflag [#allocation11], 1
    %21 = vsyncpa %s20, 0
    loop: start=0, step=1, limit=4
    $region2: #{tpu_custom_call.1} parent=1 // loop_pre_header
      _
    $region3: #{tpu_custom_call.1} parent=1 // loop_header
      %s23 = sphi 0, %s27
      %p24 = scmp.ge.s32.totalorder %s23, 4
      %s30 = sphi 0, %s42
      %s31 = sphi 0, %s38
      %s32 = sphi 0, %s30
      %s33 = sphi 0, %s31
      %s34 = sphi 0, %s32
      %s35 = sphi 0, %s33
      %s47 = sphi 0, %s49
      %s50 = sphi 0, %s47
      %s51 = sphi 0, %s50
      %s67 = sphi 0, %s51
      %s71 = sphi 0, %s71
      %s73 = sphi 0, %s71
      %s74 = sphi 0, %s73
      %s88 = sphi 0, %s74
      %s92 = sphi 0, %s92
      %s94 = sphi 0, %s92
      %s95 = sphi 0, %s94
      %s109 = sphi 0, %s95
      %s113 = sphi 0, %s113
      %s115 = sphi 0, %s113
      %s116 = sphi 0, %s115
      %s130 = sphi 0, %s116
      %s138 = sphi 0, %s140
      %s141 = sphi 0, %s138
      %s142 = sphi 0, %s141
      %s158 = sphi 0, %s142
      %s166 = sphi 0, %s168
      %s169 = sphi 0, %s166
      %s170 = sphi 0, %s169
      %s186 = sphi 0, %s170
    $region4: #{tpu_custom_call.1} parent=1 // loop_header_branch
      %26 = sbr.rel (%p24) target = $region8
    $region5: #{tpu_custom_call.1} parent=1 // loop_body
      %s28 = ssub.s32 %s23, 1
      %s29 = ssub.s32 %s23, 2
      %s36 = sadd.s32 1, %s31
      %p37 = scmp.ge.s32.totalorder %s36, 1
      %s38 = scalar_select %p37, 0, %s36
      %s39 = sadd.s32 1, %s30
      %s40 = scalar_select %p37, %s39, %s30
      %p41 = scmp.ge.s32.totalorder %s40, 2
      %s42 = scalar_select %p41, 0, %s40
      %s43 = ssub.s32 %s30, %s42
      %s44 = ssub.s32 %s31, %s38
      %s45 = sor.u32 %s43, %s44
      %p46 = scmp.eq.s32.totalorder %s45, 0
      %s48 = sadd.s32 %s47, 1
      %s49 = scalar_select %p46, %s47, %s48
      %p52 = pneg %p46
      %p53 = scmp.eq.s32.totalorder %s23, 1
      %p54 = por %p52, %p53
      %p55 = scmp.ne.s32.totalorder %s47, %s50
      %p56 = scmp.eq.s32.totalorder %s23, 0
      %p57 = por %p55, %p56
      %p58 = scmp.ne.s32.totalorder %s47, %s50
      %p59 = scmp.eq.s32.totalorder %s28, 1
      %p60 = por %p58, %p59
      %p61 = scmp.ne.s32.totalorder %s50, %s51
      %p62 = scmp.eq.s32.totalorder %s28, 0
      %p63 = por %p61, %p62
      %p64 = scmp.ne.s32.totalorder %s50, %s51
      %p65 = scmp.eq.s32.totalorder %s29, 1
      %p66 = por %p64, %p65
      %p68 = scmp.ne.s32.totalorder %s51, %s67
      %p69 = scmp.eq.s32.totalorder %s29, 0
      %p70 = por %p68, %p69
      %s72 = sadd.s32 %s71, 1
      %p75 = scmp.eq.s32.totalorder %s23, 1
      %p76 = scmp.ne.s32.totalorder %s71, %s73
      %p77 = scmp.eq.s32.totalorder %s23, 0
      %p78 = por %p76, %p77
      %p79 = scmp.ne.s32.totalorder %s71, %s73
      %p80 = scmp.eq.s32.totalorder %s28, 1
      %p81 = por %p79, %p80
      %p82 = scmp.ne.s32.totalorder %s73, %s74
      %p83 = scmp.eq.s32.totalorder %s28, 0
      %p84 = por %p82, %p83
      %p85 = scmp.ne.s32.totalorder %s73, %s74
      %p86 = scmp.eq.s32.totalorder %s29, 1
      %p87 = por %p85, %p86
      %p89 = scmp.ne.s32.totalorder %s74, %s88
      %p90 = scmp.eq.s32.totalorder %s29, 0
      %p91 = por %p89, %p90
      %s93 = sadd.s32 %s92, 1
      %p96 = scmp.eq.s32.totalorder %s23, 1
      %p97 = scmp.ne.s32.totalorder %s92, %s94
      %p98 = scmp.eq.s32.totalorder %s23, 0
      %p99 = por %p97, %p98
      %p100 = scmp.ne.s32.totalorder %s92, %s94
      %p101 = scmp.eq.s32.totalorder %s28, 1
      %p102 = por %p100, %p101
      %p103 = scmp.ne.s32.totalorder %s94, %s95
      %p104 = scmp.eq.s32.totalorder %s28, 0
      %p105 = por %p103, %p104
      %p106 = scmp.ne.s32.totalorder %s94, %s95
      %p107 = scmp.eq.s32.totalorder %s29, 1
      %p108 = por %p106, %p107
      %p110 = scmp.ne.s32.totalorder %s95, %s109
      %p111 = scmp.eq.s32.totalorder %s29, 0
      %p112 = por %p110, %p111
      %s114 = sadd.s32 %s113, 1
      %p117 = scmp.eq.s32.totalorder %s23, 1
      %p118 = scmp.ne.s32.totalorder %s113, %s115
      %p119 = scmp.eq.s32.totalorder %s23, 0
      %p120 = por %p118, %p119
      %p121 = scmp.ne.s32.totalorder %s113, %s115
      %p122 = scmp.eq.s32.totalorder %s28, 1
      %p123 = por %p121, %p122
      %p124 = scmp.ne.s32.totalorder %s115, %s116
      %p125 = scmp.eq.s32.totalorder %s28, 0
      %p126 = por %p124, %p125
      %p127 = scmp.ne.s32.totalorder %s115, %s116
      %p128 = scmp.eq.s32.totalorder %s29, 1
      %p129 = por %p127, %p128
      %p131 = scmp.ne.s32.totalorder %s116, %s130
      %p132 = scmp.eq.s32.totalorder %s29, 0
      %p133 = por %p131, %p132
      %s134 = ssub.s32 %s30, %s42
      %s135 = ssub.s32 %s31, %s38
      %s136 = sor.u32 %s134, %s135
      %p137 = scmp.eq.s32.totalorder %s136, 0
      %s139 = sadd.s32 %s138, 1
      %s140 = scalar_select %p137, %s138, %s139
      %p143 = pneg %p137
      %p144 = scmp.eq.s32.totalorder %s23, 1
      %p145 = por %p143, %p144
      %p146 = scmp.ne.s32.totalorder %s138, %s141
      %p147 = scmp.eq.s32.totalorder %s23, 0
      %p148 = por %p146, %p147
      %p149 = scmp.ne.s32.totalorder %s138, %s141
      %p150 = scmp.eq.s32.totalorder %s28, 1
      %p151 = por %p149, %p150
      %p152 = scmp.ne.s32.totalorder %s141, %s142
      %p153 = scmp.eq.s32.totalorder %s28, 0
      %p154 = por %p152, %p153
      %p155 = scmp.ne.s32.totalorder %s141, %s142
      %p156 = scmp.eq.s32.totalorder %s29, 1
      %p157 = por %p155, %p156
      %p159 = scmp.ne.s32.totalorder %s142, %s158
      %p160 = scmp.eq.s32.totalorder %s29, 0
      %p161 = por %p159, %p160
      %s162 = ssub.s32 %s30, %s42
      %s163 = ssub.s32 %s31, %s38
      %s164 = sor.u32 %s162, %s163
      %p165 = scmp.eq.s32.totalorder %s164, 0
      %s167 = sadd.s32 %s166, 1
      %s168 = scalar_select %p165, %s166, %s167
      %p171 = pneg %p165
      %p172 = scmp.eq.s32.totalorder %s23, 1
      %p173 = por %p171, %p172
      %p174 = scmp.ne.s32.totalorder %s166, %s169
      %p175 = scmp.eq.s32.totalorder %s23, 0
      %p176 = por %p174, %p175
      %p177 = scmp.ne.s32.totalorder %s166, %s169
      %p178 = scmp.eq.s32.totalorder %s28, 1
      %p179 = por %p177, %p178
      %p180 = scmp.ne.s32.totalorder %s169, %s170
      %p181 = scmp.eq.s32.totalorder %s28, 0
      %p182 = por %p180, %p181
      %p183 = scmp.ne.s32.totalorder %s169, %s170
      %p184 = scmp.eq.s32.totalorder %s29, 1
      %p185 = por %p183, %p184
      %p187 = scmp.ne.s32.totalorder %s170, %s186
      %p188 = scmp.eq.s32.totalorder %s29, 0
      %p189 = por %p187, %p188
      %p190 = scmp.le.s32.totalorder 1, %s23
      %p191 = scmp.lt.s32.totalorder %s23, 3
      %p192 = pnand %p190, %p191
      %p193 = pneg %p192
      // Predicated region
      $region9: #{tpu_custom_call.1} parent=5 // pred_check
        _
      $region10: #{tpu_custom_call.1} parent=5 // pred_check_branch
        %195 = sbr.rel (%p192) target = $region12
      $region11: #{tpu_custom_call.1} parent=5 // pred_region
        %s196 = ssub.s32 %s23, 1
        // Predicated region
        $region13: #{tpu_custom_call.1} parent=11 // pred_check
          %p197 = pneg %p84
        $region14: #{tpu_custom_call.1} parent=11 // pred_check_branch
          %199 = sbr.rel (%p197) target = $region16
        $region15: #{tpu_custom_call.1} parent=11 // pred_region
          %s201 = ssub.s32 256, 256
          %202 = vsyncadd [#allocation7], %s201
          %s203 = sshll.u32 [#allocation6], 4
          %s204 = int_to_ptr.vmem [resolvable:$true] %s203
          %209 = dma.hbm_to_vmem [thread:$0]  %s1, 256, %s204, [#allocation7], 64, 64, 4
        $region16: #{tpu_custom_call.1} parent=11 // pred_fallthru
          _
        // Predicated region
        $region17: #{tpu_custom_call.1} parent=11 // pred_check
          %p210 = pneg %p105
        $region18: #{tpu_custom_call.1} parent=11 // pred_check_branch
          %212 = sbr.rel (%p210) target = $region20
        $region19: #{tpu_custom_call.1} parent=11 // pred_region
          _
        $region20: #{tpu_custom_call.1} parent=11 // pred_fallthru
          _
        // Predicated region
        $region21: #{tpu_custom_call.1} parent=11 // pred_check
          %p213 = pneg %p126
        $region22: #{tpu_custom_call.1} parent=11 // pred_check_branch
          %215 = sbr.rel (%p213) target = $region24
        $region23: #{tpu_custom_call.1} parent=11 // pred_region
          %s217 = ssub.s32 16, 16
          %218 = vsyncadd [#allocation5], %s217
          %s220 = sshll.u32 %s3, 4
          %s221 = int_to_ptr.vmem [resolvable:$true] %s220
          %223 = dma.vmem_to_smem %s221, 16, [#allocation8], [#allocation5]
        $region24: #{tpu_custom_call.1} parent=11 // pred_fallthru
          _
      $region12: #{tpu_custom_call.1} parent=5 // pred_fallthru
        _
      %p224 = scmp.lt.s32.totalorder %s23, 2
      // Predicated region
      $region25: #{tpu_custom_call.1} parent=5 // pred_check
        %p225 = pneg %p224
      $region26: #{tpu_custom_call.1} parent=5 // pred_check_branch
        %227 = sbr.rel (%p225) target = $region28
      $region27: #{tpu_custom_call.1} parent=5 // pred_region
        // Predicated region
        $region29: #{tpu_custom_call.1} parent=27 // pred_check
          %p228 = pneg %p57
        $region30: #{tpu_custom_call.1} parent=27 // pred_check_branch
          %230 = sbr.rel (%p228) target = $region32
        $region31: #{tpu_custom_call.1} parent=27 // pred_region
          %s231 = sand.u32 %s47, 1
          %s232 = scalar_lea.sflag [#allocation3], %s231
          %s233 = sand.u32 %s47, 1
          %s234 = smul.addr %s233, 4
          %s235 = scalar_lea.vmem [#allocation2], %s234
          %s237 = ssub.s32 64, 64
          %238 = vsyncadd %s232, %s237
          %s239 = sadd.s32 %s31, %s30
          %s240 = smul.addr %s239, 64
          %s241 = scalar_lea.hbm %s0, %s240
          %s243 = sshll.u32 %s235, 4
          %s244 = int_to_ptr.vmem [resolvable:$true] %s243
          %246 = dma.hbm_to_vmem [thread:$0]  %s241, 64, %s244, %s232
        $region32: #{tpu_custom_call.1} parent=27 // pred_fallthru
          _
      $region28: #{tpu_custom_call.1} parent=5 // pred_fallthru
        _
      %p247 = scmp.le.s32.totalorder 1, %s23
      %p248 = scmp.lt.s32.totalorder %s23, 3
      %p249 = pnand %p247, %p248
      %p250 = pneg %p249
      // Predicated region
      $region33: #{tpu_custom_call.1} parent=5 // pred_check
        _
      $region34: #{tpu_custom_call.1} parent=5 // pred_check_branch
        %252 = sbr.rel (%p249) target = $region36
      $region35: #{tpu_custom_call.1} parent=5 // pred_region
        %s253 = ssub.s32 %s23, 1
        %s254 = sand.u32 %s50, 1
        %s255 = scalar_lea.sflag [#allocation3], %s254
        %s256 = sand.u32 %s50, 1
        %s257 = smul.addr %s256, 4
        %s258 = scalar_lea.vmem [#allocation2], %s257
        // Predicated region
        $region37: #{tpu_custom_call.1} parent=35 // pred_check
          %p259 = pneg %p63
        $region38: #{tpu_custom_call.1} parent=35 // pred_check_branch
          %261 = sbr.rel (%p259) target = $region40
        $region39: #{tpu_custom_call.1} parent=35 // pred_region
          %262 = dma.done %s255, 64
        $region40: #{tpu_custom_call.1} parent=35 // pred_fallthru
          _
        // Predicated region
        $region41: #{tpu_custom_call.1} parent=35 // pred_check
          %p263 = pneg %p84
        $region42: #{tpu_custom_call.1} parent=35 // pred_check_branch
          %265 = sbr.rel (%p263) target = $region44
        $region43: #{tpu_custom_call.1} parent=35 // pred_region
          %266 = dma.done [#allocation7], 256
        $region44: #{tpu_custom_call.1} parent=35 // pred_fallthru
          _
        // Predicated region
        $region45: #{tpu_custom_call.1} parent=35 // pred_check
          %p267 = pneg %p126
        $region46: #{tpu_custom_call.1} parent=35 // pred_check_branch
          %269 = sbr.rel (%p267) target = $region48
        $region47: #{tpu_custom_call.1} parent=35 // pred_region
          %270 = dma.done [#allocation5], 16
        $region48: #{tpu_custom_call.1} parent=35 // pred_fallthru
          _
        %271 = sfence
        %s272 = sand.u32 %s50, 1
        %s273 = scalar_lea.sflag [#allocation3], %s272
        %s274 = sand.u32 %s50, 1
        %s275 = smul.addr %s274, 4
        %s276 = scalar_lea.vmem [#allocation2], %s275
        %p277 = pneg %p63
        %p278 = pneg %p60
        %p279 = pneg %p84
        %p280 = pneg %p81
        %p281 = pneg %p105
        %p282 = pneg %p102
        %p283 = pneg %p126
        %p284 = pneg %p123
        %p285 = pneg %p154
        %p286 = pneg %p151
        %s287 = sand.u32 %s141, 1
        %s288 = scalar_lea.sflag [#allocation4], %s287
        %s289 = sand.u32 %s141, 1
        %s290 = smul.addr %s289, 4
        %s291 = scalar_lea.vmem [#allocation9], %s290
        %p292 = pneg %p182
        %p293 = pneg %p179
        %s294 = sand.u32 %s169, 1
        %s295 = scalar_lea.sflag [#allocation11], %s294
        %s296 = sand.u32 %s169, 1
        %s297 = smul.addr %s296, 8
        %s298 = scalar_lea.vmem [#allocation10], %s297
        %v300 = vld [vmem:[%s258] sm:$0xf]
        %v301 = vld [vmem:[#allocation6] sm:$0xf]
        %v302 = vld [vmem:[#allocation6 + $0x4] sm:$0xf]
        %v303 = vld [vmem:[#allocation6 + $0x8] sm:$0xf]
        %v304 = vld [vmem:[#allocation6 + $0xc] sm:$0xf]
        %v305 = vld [vmem:[%s2] sm:$0x1]
        %v306 = vlaneseq
        %v307 = vshrl.u32 %v306, 7
        %v308 = vsub.s32 0, %v307
        %v309 = vrot.slane %v305, %v308
        %v314 = vunpack.c.l.b16 %v301
        %v315 = vunpack.c.l.b16 %v302
        %v316 = vunpack.c.l.b16 %v303
        %v317 = vunpack.c.l.b16 %v304
        %v318 = vpack.c.b16 %v315, %v314
        %v319 = vpack.c.b16 %v317, %v316
        %vm322 = vcmask 261120
        %v324 = vsel %vm322, %v300, 0
        %326 = vmatprep.subr.bf16.mxu0 0
        %327 = vmatpush1.bf16.msra.mxu0 %v318
        %328 = vmatprep.subr.bf16.mxu0 0
        %329 = vmatpush1.bf16.msra.mxu0 %v319
        %330 = vmatprep.subr.bf16.mxu0 0
        %331 = vmatpush1.bf16.msra.mxu0 0
        %332 = vmatprep.subr.bf16.mxu0 0
        %333 = vmatpush1.bf16.msra.mxu0 0
        %334 = vmatprep.subr.bf16.mxu0 0
        %335 = vmatpush1.bf16.msra.mxu0 0
        %336 = vmatprep.subr.bf16.mxu0 0
        %337 = vmatpush1.bf16.msra.mxu0 0
        %338 = vmatprep.subr.bf16.mxu0 0
        %339 = vmatpush1.bf16.msra.mxu0 0
        %340 = vmatprep.subr.bf16.mxu0 0
        %341 = vmatpush1.bf16.msra.mxu0 0
        %342 = vmatprep.subr.bf16.mxu0 0
        %343 = vmatpush1.bf16.msra.mxu0 0
        %344 = vmatprep.subr.bf16.mxu0 0
        %345 = vmatpush1.bf16.msra.mxu0 0
        %346 = vmatprep.subr.bf16.mxu0 0
        %347 = vmatpush1.bf16.msra.mxu0 0
        %348 = vmatprep.subr.bf16.mxu0 0
        %349 = vmatpush1.bf16.msra.mxu0 0
        %350 = vmatprep.subr.bf16.mxu0 0
        %351 = vmatpush1.bf16.msra.mxu0 0
        %352 = vmatprep.subr.bf16.mxu0 0
        %353 = vmatpush1.bf16.msra.mxu0 0
        %354 = vmatprep.subr.bf16.mxu0 0
        %355 = vmatpush1.bf16.msra.mxu0 0
        %356 = vmatprep.subr.bf16.mxu0 0
        %357 = vmatpush1.bf16.msra.mxu0 0
        %358 = vmatprep.mubr.bf16.mxu0 0
        %359 = vmatmul.mubr.bf16.gmra.mrb[0].mxu0 %v324
        %v360 = vpop.f32.mrb[0].mxu0
        %v361 = vadd.f32 %v309, %v360
        %v362 = vpop.f32.mrb[0].mxu0
        %v363 = vpop.f32.mrb[0].mxu0
        %v364 = vpop.f32.mrb[0].mxu0
        %365 = vdwg.mxu0
        %v366 = vpack.c.bf16 %v361, %v361
        %v367 = vtanh.bf16.pop %v366
        %vm368 = vcmask 257024
        %369 = vst.msk [vmem:[%s291] sm:$0xf] %vm368, %v367
        %v370 = vunpack.c.l.bf16 %v367
        %v371 = vld [vmem:[%s2 + $0x1] sm:$0x1]
        %v373 = vrot.slane %v371, 1
        %v375 = vmul.f32 %v370, %v373
        %vm376 = vcmask 261127
        %v377 = vsel %vm376, %v375, 0.0
        %378 = vadd.xlane.f32.xlu0 %v377
        %v379 = vpop.xlane.xlu0 %378
        %s380 = sld [smem:[#allocation8]]
        %v381 = vstv %s380
        %v382 = vadd.f32 %v379, %v381
        %s383 = sld [smem:[#allocation8 + $0x1]]
        %v384 = vstv %s383
        %v385 = vmul.f32 %v384, %v382
        %s386 = sld [smem:[#allocation8 + $0x2]]
        %v387 = vstv %s386
        %v388 = vadd.f32 %v385, %v387
        %v389 = vlaneseq
        %v390 = vshrl.u32 %v389, 7
        %v391 = vsub.s32 7, %v390
        %v392 = vrot.slane %v388, %v391
        %393 = vst [vmem:[%s298] sm:$0xff] %v392
        %s394 = sand.u32 %s141, 1
        %s395 = scalar_lea.sflag [#allocation4], %s394
        %s396 = sand.u32 %s141, 1
        %s397 = smul.addr %s396, 4
        %s398 = scalar_lea.vmem [#allocation9], %s397
        %s399 = sand.u32 %s169, 1
        %s400 = scalar_lea.sflag [#allocation11], %s399
        %s401 = sand.u32 %s169, 1
        %s402 = smul.addr %s401, 8
        %s403 = scalar_lea.vmem [#allocation10], %s402
        // Predicated region
        $region49: #{tpu_custom_call.1} parent=35 // pred_check
          %p404 = pneg %p151
        $region50: #{tpu_custom_call.1} parent=35 // pred_check_branch
          %406 = sbr.rel (%p404) target = $region52
        $region51: #{tpu_custom_call.1} parent=35 // pred_region
          %s408 = ssub.s32 64, 64
          %409 = vsyncadd %s395, %s408
          %s410 = sadd.s32 %s33, %s32
          %s411 = smul.addr %s410, 64
          %s412 = scalar_lea.hbm %s4, %s411
          %s414 = sshll.u32 %s398, 4
          %s415 = int_to_ptr.vmem [resolvable:$true] %s414
          %417 = dma.vmem_to_hbm [thread:$0]  %s415, 64, %s412, %s395
        $region52: #{tpu_custom_call.1} parent=35 // pred_fallthru
          _
        // Predicated region
        $region53: #{tpu_custom_call.1} parent=35 // pred_check
          %p418 = pneg %p179
        $region54: #{tpu_custom_call.1} parent=35 // pred_check_branch
          %420 = sbr.rel (%p418) target = $region56
        $region55: #{tpu_custom_call.1} parent=35 // pred_region
          %s422 = ssub.s32 128, 128
          %423 = vsyncadd %s400, %s422
          %s424 = sadd.s32 %s33, %s32
          %s425 = smul.addr %s424, 128
          %s426 = scalar_lea.hbm %s5, %s425
          %s428 = sshll.u32 %s403, 4
          %s429 = int_to_ptr.vmem [resolvable:$true] %s428
          %431 = dma.vmem_to_hbm [thread:$0]  %s429, 128, %s426, %s400
        $region56: #{tpu_custom_call.1} parent=35 // pred_fallthru
          _
      $region36: #{tpu_custom_call.1} parent=5 // pred_fallthru
        _
      %p432 = scmp.le.s32.totalorder 2, %s23
      // Predicated region
      $region57: #{tpu_custom_call.1} parent=5 // pred_check
        %p433 = pneg %p432
      $region58: #{tpu_custom_call.1} parent=5 // pred_check_branch
        %435 = sbr.rel (%p433) target = $region60
      $region59: #{tpu_custom_call.1} parent=5 // pred_region
        %s436 = ssub.s32 %s23, 2
        // Predicated region
        $region61: #{tpu_custom_call.1} parent=59 // pred_check
          %p437 = pneg %p157
        $region62: #{tpu_custom_call.1} parent=59 // pred_check_branch
          %439 = sbr.rel (%p437) target = $region64
        $region63: #{tpu_custom_call.1} parent=59 // pred_region
          %s440 = sand.u32 %s142, 1
          %s441 = scalar_lea.sflag [#allocation4], %s440
          %s442 = sand.u32 %s142, 1
          %s443 = smul.addr %s442, 4
          %s444 = scalar_lea.vmem [#allocation9], %s443
          %445 = dma.done %s441, 64
        $region64: #{tpu_custom_call.1} parent=59 // pred_fallthru
          _
        // Predicated region
        $region65: #{tpu_custom_call.1} parent=59 // pred_check
          %p446 = pneg %p185
        $region66: #{tpu_custom_call.1} parent=59 // pred_check_branch
          %448 = sbr.rel (%p446) target = $region68
        $region67: #{tpu_custom_call.1} parent=59 // pred_region
          %s449 = sand.u32 %s170, 1
          %s450 = scalar_lea.sflag [#allocation11], %s449
          %s451 = sand.u32 %s170, 1
          %s452 = smul.addr %s451, 8
          %s453 = scalar_lea.vmem [#allocation10], %s452
          %454 = dma.done %s450, 128
        $region68: #{tpu_custom_call.1} parent=59 // pred_fallthru
          _
      $region60: #{tpu_custom_call.1} parent=5 // pred_fallthru
        _
    $region6: #{tpu_custom_call.1} parent=1 // loop_footer
      %s27 = sadd.s32 1, %s23
    $region7: #{tpu_custom_call.1} parent=1 // loop_footer_branch
      %22 = sbr.rel target = $region3
    $region8: #{tpu_custom_call.1} parent=1 // loop_exit
      _
    %455 = vsyncpa [#allocation3], 1
    %s456 = scalar_lea.sflag [#allocation3], 1
    %457 = vsyncpa %s456, 1
    %458 = vsyncpa [#allocation7], 1
    %459 = vsyncpa [#allocation4], 1
    %s460 = scalar_lea.sflag [#allocation4], 1
    %461 = vsyncpa %s460, 1
    %462 = vsyncpa [#allocation11], 1
    %s463 = scalar_lea.sflag [#allocation11], 1
    %464 = vsyncpa %s463, 1
    %465 = vsyncpa [#allocation5], 1
    %s466 = scalar_lea.sflag [#allocation5], 1
    %467 = vsyncpa %s466, 1

</llo_original>
